<compile_context>
chip_gen: v6e
topology: v6e:2x2x1
jax: 0.10.0
libtpu: 0.0.40
codegen_flags: <defaults>
</compile_context>

<pallas_src>
import numpy as np
import jax
import jax.numpy as jnp
from jax.experimental import pallas as pl
from jax.experimental.pallas import tpu as pltpu


# --------------------------------------------------------------------------- #
# Relative position index (replicates the PyTorch __init__ buffer, int32).
# --------------------------------------------------------------------------- #
def _build_relative_position_index(window_size):
    Wh, Ww = window_size
    num_relative_distance = (2 * Wh - 1) * (2 * Ww - 1) + 3

    coords_h = np.arange(Wh)
    coords_w = np.arange(Ww)
    coords = np.stack(np.meshgrid(coords_h, coords_w, indexing="ij"))     # (2, Wh, Ww)
    coords_flatten = coords.reshape(2, -1)                                # (2, N)
    relative_coords = coords_flatten[:, :, None] - coords_flatten[:, None, :]
    relative_coords = relative_coords.transpose(1, 2, 0).copy()           # (N, N, 2)
    relative_coords[:, :, 0] += Wh - 1
    relative_coords[:, :, 1] += Ww - 1
    relative_coords[:, :, 0] *= 2 * Ww - 1

    N = Wh * Ww
    rpi = np.zeros((N + 1, N + 1), dtype=np.int32)
    rpi[1:, 1:] = relative_coords.sum(-1)
    rpi[0, 0:] = num_relative_distance - 3
    rpi[0:, 0] = num_relative_distance - 2
    rpi[0, 0] = num_relative_distance - 1
    return rpi, num_relative_distance


# --------------------------------------------------------------------------- #
# Kernel 1: lane-dense relative-position-bias gather (runs once per forward).
# --------------------------------------------------------------------------- #
def _bias_gather_kernel(idx_ref, tableT_ref, out_ref):
    # idx_ref    : (1, T)       int32   -- flattened rel-pos index tile (lane-dense)
    # tableT_ref : (H, L_pad)   float32 -- bias table, transposed, L padded to 128k
    # out_ref    : (H, T)       float32 -- heads on sublanes, sequence on lanes
    L = tableT_ref.shape[1]
    T = idx_ref.shape[1]
    row_ids = jax.lax.broadcasted_iota(jnp.int32, (L, T), 0)          # sublane iota over L
    onehot_t = (row_ids == idx_ref[...]).astype(tableT_ref.dtype)     # (L, T)
    out_ref[...] = jnp.dot(tableT_ref[...], onehot_t,
                           preferred_element_type=jnp.float32)        # (H, T) on MXU


def relative_position_bias(table, rel_pos_index, num_heads, *, tile=1024):
    """Returns the (num_heads, S, S) bias, matching torch's permute(2, 0, 1)."""
    L = table.shape[0]
    S = rel_pos_index.shape[0]
    SS = S * S

    # Pad the contraction dim (L) to a lane-exact multiple of 128 (zero rows).
    L_pad = pl.cdiv(L, 128) * 128
    tableT = jnp.zeros((num_heads, L_pad), jnp.float32)
    tableT = tableT.at[:, :L].set(jnp.asarray(table, jnp.float32).T)

    # Lane-dense index: (1, SS_pad), SS tiled by T (multiple of 128).
    tile = pl.cdiv(tile, 128) * 128
    T = min(tile, pl.cdiv(SS, 128) * 128)
    SS_pad = pl.cdiv(SS, T) * T
    idx = jnp.zeros((1, SS_pad), jnp.int32)
    idx = idx.at[0, :SS].set(rel_pos_index.reshape(-1).astype(jnp.int32))

    out = pl.pallas_call(
        _bias_gather_kernel,
        out_shape=jax.ShapeDtypeStruct((num_heads, SS_pad), jnp.float32),
        grid=(SS_pad // T,),
        in_specs=[
            pl.BlockSpec((1, T), lambda i: (0, i)),                # idx tile
            pl.BlockSpec((num_heads, L_pad), lambda i: (0, 0)),    # table: resident
        ],
        out_specs=pl.BlockSpec((num_heads, T), lambda i: (0, i)),
        compiler_params=pltpu.CompilerParams(
            dimension_semantics=("parallel",),
            vmem_limit_bytes=32 * 1024 * 1024,
        ),
    )(idx, tableT)

    # (H, SS) -> (H, S, S) is a pure reshape (no transpose / extra HBM pass).
    return out[:, :SS].reshape(num_heads, S, S)


# --------------------------------------------------------------------------- #
# Kernel 2: per-batch attention core (all heads), bias fused into the logits.
# --------------------------------------------------------------------------- #
def _make_attention_kernel(num_heads, head_dim, scale, matmul_dtype=None):
    all_head_dim = num_heads * head_dim

    def kernel(qkv_ref, bias_ref, attn_ref, ctx_ref):
        # qkv_ref  : (1, Np, 3*H*D) f32  -- natural QKV-GEMM layout, seq padded
        # bias_ref : (H, Np, Np)    f32  -- VMEM-resident; padded cols are -1e30
        # attn_ref : (1, H, Np, Np) f32
        # ctx_ref  : (1, Np, H*D)   f32  -- lane-dense context
        for h in range(num_heads):                         # static unroll over heads
            q = qkv_ref[0, :, h * head_dim:(h + 1) * head_dim] * scale
            k = qkv_ref[0, :, all_head_dim + h * head_dim:
                              all_head_dim + (h + 1) * head_dim]
            v = qkv_ref[0, :, 2 * all_head_dim + h * head_dim:
                              2 * all_head_dim + (h + 1) * head_dim]
            if matmul_dtype is not None:
                q = q.astype(matmul_dtype)
                k = k.astype(matmul_dtype)
            logits = jax.lax.dot_general(
                q, k, (((1,), (1,)), ((), ())),
                preferred_element_type=jnp.float32)        # q @ k^T -> (Np, Np)
            logits = logits + bias_ref[h]
            m = jnp.max(logits, axis=-1, keepdims=True)
            e = jnp.exp(logits - m)
            denom = jnp.sum(e, axis=-1, keepdims=True)
            p = e * pl.reciprocal(denom, approx=False)     # EUP reciprocal, exact
            attn_ref[0, h] = p
            pv = p.astype(matmul_dtype) if matmul_dtype is not None else p
            vv = v.astype(matmul_dtype) if matmul_dtype is not None else v
            ctx_ref[0, :, h * head_dim:(h + 1) * head_dim] = jnp.dot(
                pv, vv, preferred_element_type=jnp.float32)

    return kernel


def attention_forward(x, qkv_weight, proj_weight, proj_bias, rel_pos_table,
                      rel_pos_index, *, num_heads, scale=None,
                      q_bias=None, v_bias=None, matmul_dtype=None):
    B, N, C = x.shape
    all_head_dim = qkv_weight.shape[0] // 3
    head_dim = all_head_dim // num_heads
    scale = float(head_dim ** (-0.5) if scale is None else scale)
    hi = jax.lax.Precision.HIGHEST

    # Pad the sequence axis to a lane-exact multiple of 128.
    Np = pl.cdiv(N, 128) * 128

    # ---- QKV projection (plain XLA GEMM) in the padded, natural layout ----
    # Padding x (zeros) before the GEMM keeps qkv in (B, Np, 3*H*D) with no
    # (2,0,3,1,4) transpose.  Padded key rows are neutralized by the -1e30
    # bias columns below; padded query rows are sliced off at the end.
    x_pad = jnp.pad(x, ((0, 0), (0, Np - N), (0, 0)))
    qkv = jnp.einsum("bnc,oc->bno", x_pad, qkv_weight, precision=hi)
    if q_bias is not None:
        qkv_b = jnp.concatenate([q_bias, jnp.zeros_like(v_bias), v_bias])
        qkv = qkv + qkv_b

    # ---- relative position bias via Pallas gather kernel, padded to Np ----
    bias = relative_position_bias(rel_pos_table, rel_pos_index, num_heads)  # (H,N,N)
    bias_pad = jnp.full((num_heads, Np, Np), -1e30, jnp.float32)
    bias_pad = bias_pad.at[:, :N, :N].set(bias)

    # ---- attention core via Pallas kernel, grid over batch only ----
    kernel = _make_attention_kernel(num_heads, head_dim, scale, matmul_dtype)
    attn_pad, ctx_pad = pl.pallas_call(
        kernel,
        out_shape=(
            jax.ShapeDtypeStruct((B, num_heads, Np, Np), jnp.float32),
            jax.ShapeDtypeStruct((B, Np, all_head_dim), jnp.float32),
        ),
        grid=(B,),
        in_specs=[
            pl.BlockSpec((1, Np, 3 * all_head_dim), lambda b: (b, 0, 0)),
            pl.BlockSpec((num_heads, Np, Np), lambda b: (0, 0, 0)),  # resident bias
        ],
        out_specs=(
            pl.BlockSpec((1, num_heads, Np, Np), lambda b: (b, 0, 0, 0)),
            pl.BlockSpec((1, Np, all_head_dim), lambda b: (b, 0, 0)),
        ),
        compiler_params=pltpu.CompilerParams(
            dimension_semantics=("parallel",),
            vmem_limit_bytes=48 * 1024 * 1024,   # above v5e's 16 MiB default,
                                                 # within v7x's 64 MiB physical
        ),
    )(qkv, bias_pad)

    attn = attn_pad[:, :, :N, :N]
    ctx = ctx_pad[:, :N, :]                       # already (B, N, H*D), lane-dense

    # ---- output projection (plain XLA GEMM) ----
    x_out = jnp.einsum("bnk,ok->bno", ctx, proj_weight, precision=hi) + proj_bias
    return x_out, attn


# --------------------------------------------------------------------------- #
# Pure-JAX reference (mirrors the PyTorch forward).
# --------------------------------------------------------------------------- #
def _reference_forward(x, qkv_w, q_b, v_b, proj_w, proj_b, table, rpi,
                       num_heads, scale):
    hi = jax.lax.Precision.HIGHEST
    B, N, C = x.shape
    qkv_b = jnp.concatenate([q_b, jnp.zeros_like(v_b), v_b])
    qkv = jnp.einsum("bnc,oc->bno", x, qkv_w, precision=hi) + qkv_b
    qkv = qkv.reshape(B, N, 3, num_heads, -1).transpose(2, 0, 3, 1, 4)
    q, k, v = qkv[0], qkv[1], qkv[2]
    q = q * scale
    attn = jnp.einsum("bhnd,bhmd->bhnm", q, k, precision=hi)
    S = rpi.shape[0]
    bias = table[rpi.reshape(-1)].reshape(S, S, num_heads).transpose(2, 0, 1)
    attn = attn + bias[None]
    attn = jax.nn.softmax(attn, axis=-1)
    out = jnp.einsum("bhnm,bhmd->bhnd", attn, v, precision=hi)
    out = out.transpose(0, 2, 1, 3).reshape(B, N, -1)
    out = jnp.einsum("bnk,ok->bno", out, proj_w, precision=hi) + proj_b
    return out, attn


if __name__ == "__main__":
    B, dim, num_heads = 2, 32, 4
    window_size = (4, 4)
    head_dim = dim // num_heads
    scale = head_dim ** (-0.5)
    N = window_size[0] * window_size[1] + 1        # 17

    rpi_np, num_rel_dist = _build_relative_position_index(window_size)
    rpi = jnp.asarray(rpi_np)

    key = jax.random.PRNGKey(0)
    k0, k1, k2, k3, k4, k5, k6 = jax.random.split(key, 7)
    x = jax.random.normal(k0, (B, N, dim), jnp.float32)
    qkv_w = jax.random.normal(k1, (3 * dim, dim), jnp.float32) * 0.05
    q_b = jax.random.normal(k2, (dim,), jnp.float32) * 0.02
    v_b = jax.random.normal(k3, (dim,), jnp.float32) * 0.02
    proj_w = jax.random.normal(k4, (dim, dim), jnp.float32) * 0.05
    proj_b = jax.random.normal(k5, (dim,), jnp.float32) * 0.02
    table = jax.random.normal(k6, (num_rel_dist, num_heads), jnp.float32) * 0.02

    out, attn = attention_forward(
        x, qkv_w, proj_w, proj_b, table, rpi,
        num_heads=num_heads, scale=scale, q_bias=q_b, v_bias=v_b)
    out = jax.block_until_ready(out)
    attn = jax.block_until_ready(attn)
    assert out.shape == (B, N, dim), out.shape
    assert attn.shape == (B, num_heads, N, N), attn.shape

    # Check 1: the Pallas bias gather is (bit-)exact vs a direct gather.
    bias_pallas = jax.block_until_ready(
        relative_position_bias(table, rpi, num_heads))
    bias_ref = table[rpi.reshape(-1)].reshape(N, N, num_heads).transpose(2, 0, 1)
    np.testing.assert_allclose(np.asarray(bias_pallas), np.asarray(bias_ref),
                               rtol=1e-6, atol=1e-6)

    # Check 2: full forward vs pure-JAX reference.
    ref_out, ref_attn = _reference_forward(
        x, qkv_w, q_b, v_b, proj_w, proj_b, table, rpi, num_heads, scale)
    np.testing.assert_allclose(np.asarray(attn), np.asarray(ref_attn),
                               rtol=1e-3, atol=1e-5)
    np.testing.assert_allclose(np.asarray(out), np.asarray(ref_out),
                               rtol=1e-3, atol=1e-5)

    print("KERNEL_OK")
</pallas_src>

<mosaic_0001>
module attributes {stable_mosaic.version = 11 : i64} {
  func.func @_bias_gather_kernel(%arg0: i32, %arg1: memref<1x384xi32, #tpu.memory_space<vmem>>, %arg2: memref<4x128xf32, #tpu.memory_space<vmem>>, %arg3: memref<4x384xf32, #tpu.memory_space<vmem>>) attributes {dimension_semantics = [#tpu.dimension_semantics<parallel>], iteration_bounds = array<i64: 1>, scalar_prefetch = 0 : i64, scratch_operands = 0 : i64, tpu.core_type = #tpu.core_type<tc>, window_params = [{transform_indices = @transform_0, window_bounds = array<i64: 1, 384>}, {pipeline_mode = #tpu.pipeline_mode<synchronous>, transform_indices = @transform_1, window_bounds = array<i64: 4, 128>}, {transform_indices = @transform_2, window_bounds = array<i64: 4, 384>}]} {
    %0 = tpu.iota {dimensions = array<i32: 0>} : vector<128x384xi32>
    %c0 = arith.constant 0 : index
    %c0_0 = arith.constant 0 : index
    %1 = vector.load %arg1[%c0, %c0_0] : memref<1x384xi32, #tpu.memory_space<vmem>>, vector<1x384xi32>
    %2 = vector.broadcast %1 : vector<1x384xi32> to vector<128x384xi32>
    %3 = arith.cmpi eq, %0, %2 : vector<128x384xi32>
    %4 = arith.extui %3 : vector<128x384xi1> to vector<128x384xi32>
    %5 = arith.sitofp %4 : vector<128x384xi32> to vector<128x384xf32>
    %c0_1 = arith.constant 0 : index
    %c0_2 = arith.constant 0 : index
    %6 = vector.load %arg2[%c0_1, %c0_2] : memref<4x128xf32, #tpu.memory_space<vmem>>, vector<4x128xf32>
    %cst = arith.constant dense<0.000000e+00> : vector<4x384xf32>
    %7 = tpu.matmul %6, %5, %cst {dimension_numbers = #tpu.dot_dimension_numbers<[1], [0], [0], [1], [0, 0, 1, 1], [], []>} : vector<4x128xf32>, vector<128x384xf32>, vector<4x384xf32> -> vector<4x384xf32>
    %c0_3 = arith.constant 0 : index
    %c0_4 = arith.constant 0 : index
    %8 = vector.load %arg3[%c0_3, %c0_4] : memref<4x384xf32, #tpu.memory_space<vmem>>, vector<4x384xf32>
    tpu.vector_store %arg3[%c0_3, %c0_4], %7 {strides = array<i32>} : memref<4x384xf32, #tpu.memory_space<vmem>>, vector<4x384xf32>,
    return
  }
  func.func @transform_0(%arg0: i32) -> (i32, i32) {
    %c0_i32 = arith.constant 0 : i32
    %c0_i32_0 = arith.constant 0 : i32
    return %c0_i32, %arg0 : i32, i32
  }
  func.func @transform_1(%arg0: i32) -> (i32, i32) {
    %c0_i32 = arith.constant 0 : i32
    %c0_i32_0 = arith.constant 0 : i32
    %c0_i32_1 = arith.constant 0 : i32
    return %c0_i32, %c0_i32_0 : i32, i32
  }
  func.func @transform_2(%arg0: i32) -> (i32, i32) {
    %c0_i32 = arith.constant 0 : i32
    %c0_i32_0 = arith.constant 0 : i32
    return %c0_i32, %arg0 : i32, i32
  }
}

</mosaic_0001>

<llo_original>
// kernel: tpu_custom_call.1
$region0: #{tpu_custom_call.1}
  #allocation0 [shape = 'u32[]', space=smem, size = 0x4, offset = 0x4, fixed_abs, tag = 'smem constant byte address 0x4 - core index']
  #allocation1 [shape = 'u32[144,128]{1,0:T(1,128)}', space=vmem, size = 0x12000, scoped, tag = 'internal scratch']
  %s0 = inlined_call_operand.hbm [shape: s32[1,384], index: 0, kind: input, shape index: {}]
  %s1 = inlined_call_operand.hbm [shape: f32[4,128], index: 1, kind: input, shape index: {}]
  %s2 = inlined_call_operand.hbm [shape: f32[4,384], index: 2, kind: output, shape index: {}]
  %s3 = sld [smem:[#allocation0]]
  $region26: #{tpu_custom_call.1} parent=0
    _
  %s5 = ssub.s32 1, %s3
  %s6 = scalar_select 0, %s5, %s3
  $region1: #{tpu_custom_call.1} parent=0
    #allocation2 [shape = 'u8[1536]{0}', space=vmem, size = 0x800, scoped, tag = 'input window, operand 0, single buffered']
    #allocation3 [shape = 's32[1]{0}', space=sflag, size = 0x4, scoped, tag = 'scoped memory for tpu_custom_call.1']
    #allocation4 [shape = 's32[1]{0}', space=sflag, size = 0x4, scoped, tag = 'scoped memory for tpu_custom_call.1']
    #allocation5 [shape = 'u8[2048]{0}', space=vmem, size = 0x800, scoped, tag = 'input window, operand 1, single buffered']
    #allocation6 [shape = 's32[1]{0}', space=sflag, size = 0x4, scoped, tag = 'scoped memory for tpu_custom_call.1']
    #allocation7 [shape = 'u8[6144]{0}', space=vmem, size = 0x1800, scoped, tag = 'output window, operand 0, single buffered']
    %7 = vsyncpa [#allocation3], 0
    %8 = vsyncpa [#allocation6], 0
    %9 = vsyncpa [#allocation4], 0
    // Predicated region
    $region2: #{tpu_custom_call.1} parent=1 // pred_check
      _
    $region3: #{tpu_custom_call.1} parent=1 // pred_check_branch
      %11 = sbr.rel (0) target = $region5
    $region4: #{tpu_custom_call.1} parent=1 // pred_region
      %s13 = ssub.s32 48, 48
      %14 = vsyncadd [#allocation3], %s13
      %s16 = sshll.u32 [#allocation2], 4
      %s17 = int_to_ptr.vmem [resolvable:$true] %s16
      %19 = dma.hbm_to_vmem [thread:$0]  %s0, 48, %s17, [#allocation3]
    $region5: #{tpu_custom_call.1} parent=1 // pred_fallthru
      _
    // Predicated region
    $region6: #{tpu_custom_call.1} parent=1 // pred_check
      _
    $region7: #{tpu_custom_call.1} parent=1 // pred_check_branch
      %21 = sbr.rel (0) target = $region9
    $region8: #{tpu_custom_call.1} parent=1 // pred_region
      %s23 = ssub.s32 64, 64
      %24 = vsyncadd [#allocation6], %s23
      %s26 = sshll.u32 [#allocation5], 4
      %s27 = int_to_ptr.vmem [resolvable:$true] %s26
      %29 = dma.hbm_to_vmem [thread:$0]  %s1, 64, %s27, [#allocation6]
    $region9: #{tpu_custom_call.1} parent=1 // pred_fallthru
      _
    // Predicated region
    $region10: #{tpu_custom_call.1} parent=1 // pred_check
      _
    $region11: #{tpu_custom_call.1} parent=1 // pred_check_branch
      %31 = sbr.rel (0) target = $region13
    $region12: #{tpu_custom_call.1} parent=1 // pred_region
      %32 = dma.done [#allocation3], 48
    $region13: #{tpu_custom_call.1} parent=1 // pred_fallthru
      _
    // Predicated region
    $region14: #{tpu_custom_call.1} parent=1 // pred_check
      _
    $region15: #{tpu_custom_call.1} parent=1 // pred_check_branch
      %34 = sbr.rel (0) target = $region17
    $region16: #{tpu_custom_call.1} parent=1 // pred_region
      %35 = dma.done [#allocation6], 64
    $region17: #{tpu_custom_call.1} parent=1 // pred_fallthru
      _
    %v36 = vlaneseq
    %v37 = vshrl.u32 %v36, 7
    %v38 = vadd.s32 %v37, 8
    %v39 = vadd.s32 %v37, 16
    %v40 = vadd.s32 %v37, 24
    %v41 = vadd.s32 %v37, 32
    %v42 = vadd.s32 %v37, 40
    %v43 = vadd.s32 %v37, 48
    %v44 = vadd.s32 %v37, 56
    %v45 = vadd.s32 %v37, 64
    %v46 = vadd.s32 %v37, 72
    %v47 = vadd.s32 %v37, 80
    %v48 = vadd.s32 %v37, 88
    %v49 = vadd.s32 %v37, 96
    %v50 = vadd.s32 %v37, 104
    %v51 = vadd.s32 %v37, 112
    %v52 = vadd.s32 %v37, 120
    %v53 = vld [vmem:[#allocation2] sm:$0x7]
    %v54 = vlaneseq
    %v55 = vshrl.u32 %v54, 7
    %v56 = vsub.s32 0, %v55
    %v57 = vrot.slane %v53, %v56
    %v58 = vlaneseq
    %v59 = vshrl.u32 %v58, 7
    %v60 = vsub.s32 1, %v59
    %v61 = vrot.slane %v53, %v60
    %v62 = vlaneseq
    %v63 = vshrl.u32 %v62, 7
    %v64 = vsub.s32 2, %v63
    %v65 = vrot.slane %v53, %v64
    %vm66 = vcmp.eq.s32.totalorder %v37, %v57
    %vm67 = vcmp.eq.s32.totalorder %v37, %v61
    %vm68 = vcmp.eq.s32.totalorder %v37, %v65
    %vm69 = vcmp.eq.s32.totalorder %v38, %v57
    %vm70 = vcmp.eq.s32.totalorder %v38, %v61
    %vm71 = vcmp.eq.s32.totalorder %v38, %v65
    %vm72 = vcmp.eq.s32.totalorder %v39, %v57
    %vm73 = vcmp.eq.s32.totalorder %v39, %v61
    %vm74 = vcmp.eq.s32.totalorder %v39, %v65
    %vm75 = vcmp.eq.s32.totalorder %v40, %v57
    %vm76 = vcmp.eq.s32.totalorder %v40, %v61
    %vm77 = vcmp.eq.s32.totalorder %v40, %v65
    %vm78 = vcmp.eq.s32.totalorder %v41, %v57
    %vm79 = vcmp.eq.s32.totalorder %v41, %v61
    %vm80 = vcmp.eq.s32.totalorder %v41, %v65
    %vm81 = vcmp.eq.s32.totalorder %v42, %v57
    %vm82 = vcmp.eq.s32.totalorder %v42, %v61
    %vm83 = vcmp.eq.s32.totalorder %v42, %v65
    %vm84 = vcmp.eq.s32.totalorder %v43, %v57
    %vm85 = vcmp.eq.s32.totalorder %v43, %v61
    %vm86 = vcmp.eq.s32.totalorder %v43, %v65
    %vm87 = vcmp.eq.s32.totalorder %v44, %v57
    %vm88 = vcmp.eq.s32.totalorder %v44, %v61
    %vm89 = vcmp.eq.s32.totalorder %v44, %v65
    %vm90 = vcmp.eq.s32.totalorder %v45, %v57
    %vm91 = vcmp.eq.s32.totalorder %v45, %v61
    %vm92 = vcmp.eq.s32.totalorder %v45, %v65
    %vm93 = vcmp.eq.s32.totalorder %v46, %v57
    %vm94 = vcmp.eq.s32.totalorder %v46, %v61
    %vm95 = vcmp.eq.s32.totalorder %v46, %v65
    %vm96 = vcmp.eq.s32.totalorder %v47, %v57
    %vm97 = vcmp.eq.s32.totalorder %v47, %v61
    %vm98 = vcmp.eq.s32.totalorder %v47, %v65
    %vm99 = vcmp.eq.s32.totalorder %v48, %v57
    %vm100 = vcmp.eq.s32.totalorder %v48, %v61
    %vm101 = vcmp.eq.s32.totalorder %v48, %v65
    %vm102 = vcmp.eq.s32.totalorder %v49, %v57
    %vm103 = vcmp.eq.s32.totalorder %v49, %v61
    %vm104 = vcmp.eq.s32.totalorder %v49, %v65
    %vm105 = vcmp.eq.s32.totalorder %v50, %v57
    %vm106 = vcmp.eq.s32.totalorder %v50, %v61
    %vm107 = vcmp.eq.s32.totalorder %v50, %v65
    %vm108 = vcmp.eq.s32.totalorder %v51, %v57
    %vm109 = vcmp.eq.s32.totalorder %v51, %v61
    %vm110 = vcmp.eq.s32.totalorder %v51, %v65
    %vm111 = vcmp.eq.s32.totalorder %v52, %v57
    %vm112 = vcmp.eq.s32.totalorder %v52, %v61
    %vm113 = vcmp.eq.s32.totalorder %v52, %v65
    %v114 = vsel %vm66, 1, 0
    %v115 = vsel %vm67, 1, 0
    %v116 = vsel %vm68, 1, 0
    %v117 = vsel %vm69, 1, 0
    %v118 = vsel %vm70, 1, 0
    %v119 = vsel %vm71, 1, 0
    %v120 = vsel %vm72, 1, 0
    %v121 = vsel %vm73, 1, 0
    %v122 = vsel %vm74, 1, 0
    %v123 = vsel %vm75, 1, 0
    %v124 = vsel %vm76, 1, 0
    %v125 = vsel %vm77, 1, 0
    %v126 = vsel %vm78, 1, 0
    %v127 = vsel %vm79, 1, 0
    %v128 = vsel %vm80, 1, 0
    %v129 = vsel %vm81, 1, 0
    %v130 = vsel %vm82, 1, 0
    %v131 = vsel %vm83, 1, 0
    %v132 = vsel %vm84, 1, 0
    %v133 = vsel %vm85, 1, 0
    %v134 = vsel %vm86, 1, 0
    %v135 = vsel %vm87, 1, 0
    %v136 = vsel %vm88, 1, 0
    %v137 = vsel %vm89, 1, 0
    %v138 = vsel %vm90, 1, 0
    %v139 = vsel %vm91, 1, 0
    %v140 = vsel %vm92, 1, 0
    %v141 = vsel %vm93, 1, 0
    %v142 = vsel %vm94, 1, 0
    %v143 = vsel %vm95, 1, 0
    %v144 = vsel %vm96, 1, 0
    %v145 = vsel %vm97, 1, 0
    %v146 = vsel %vm98, 1, 0
    %v147 = vsel %vm99, 1, 0
    %v148 = vsel %vm100, 1, 0
    %v149 = vsel %vm101, 1, 0
    %v150 = vsel %vm102, 1, 0
    %v151 = vsel %vm103, 1, 0
    %v152 = vsel %vm104, 1, 0
    %v153 = vsel %vm105, 1, 0
    %v154 = vsel %vm106, 1, 0
    %v155 = vsel %vm107, 1, 0
    %v156 = vsel %vm108, 1, 0
    %v157 = vsel %vm109, 1, 0
    %v158 = vsel %vm110, 1, 0
    %v159 = vsel %vm111, 1, 0
    %v160 = vsel %vm112, 1, 0
    %v161 = vsel %vm113, 1, 0
    %v162 = vcvt.s32.f32 %v114
    %v163 = vcvt.s32.f32 %v115
    %v164 = vcvt.s32.f32 %v116
    %v165 = vcvt.s32.f32 %v117
    %v166 = vcvt.s32.f32 %v118
    %v167 = vcvt.s32.f32 %v119
    %v168 = vcvt.s32.f32 %v120
    %v169 = vcvt.s32.f32 %v121
    %v170 = vcvt.s32.f32 %v122
    %v171 = vcvt.s32.f32 %v123
    %v172 = vcvt.s32.f32 %v124
    %v173 = vcvt.s32.f32 %v125
    %v174 = vcvt.s32.f32 %v126
    %v175 = vcvt.s32.f32 %v127
    %v176 = vcvt.s32.f32 %v128
    %v177 = vcvt.s32.f32 %v129
    %v178 = vcvt.s32.f32 %v130
    %v179 = vcvt.s32.f32 %v131
    %v180 = vcvt.s32.f32 %v132
    %v181 = vcvt.s32.f32 %v133
    %v182 = vcvt.s32.f32 %v134
    %v183 = vcvt.s32.f32 %v135
    %v184 = vcvt.s32.f32 %v136
    %v185 = vcvt.s32.f32 %v137
    %v186 = vcvt.s32.f32 %v138
    %v187 = vcvt.s32.f32 %v139
    %v188 = vcvt.s32.f32 %v140
    %v189 = vcvt.s32.f32 %v141
    %v190 = vcvt.s32.f32 %v142
    %v191 = vcvt.s32.f32 %v143
    %v192 = vcvt.s32.f32 %v144
    %v193 = vcvt.s32.f32 %v145
    %v194 = vcvt.s32.f32 %v146
    %v195 = vcvt.s32.f32 %v147
    %v196 = vcvt.s32.f32 %v148
    %v197 = vcvt.s32.f32 %v149
    %v198 = vcvt.s32.f32 %v150
    %v199 = vcvt.s32.f32 %v151
    %v200 = vcvt.s32.f32 %v152
    %v201 = vcvt.s32.f32 %v153
    %v202 = vcvt.s32.f32 %v154
    %v203 = vcvt.s32.f32 %v155
    %v204 = vcvt.s32.f32 %v156
    %v205 = vcvt.s32.f32 %v157
    %v206 = vcvt.s32.f32 %v158
    %v207 = vcvt.s32.f32 %v159
    %v208 = vcvt.s32.f32 %v160
    %v209 = vcvt.s32.f32 %v161
    %v210 = vld [vmem:[#allocation5] sm:$0xf]
    %211 = vmatprep.subr.mxu0 %v208
    %212 = vmatpush1.msra.mxu0 %v207
    %213 = vmatprep.subr.mxu0 %v205
    %214 = vmatpush1.msra.mxu0 %v204
    %215 = vmatprep.subr.mxu0 %v202
    %216 = vmatpush1.msra.mxu0 %v201
    %217 = vmatprep.subr.mxu0 %v199
    %218 = vmatpush1.msra.mxu0 %v198
    %219 = vmatprep.subr.mxu0 %v196
    %220 = vmatpush1.msra.mxu0 %v195
    %221 = vmatprep.subr.mxu0 %v193
    %222 = vmatpush1.msra.mxu0 %v192
    %223 = vmatprep.subr.mxu0 %v190
    %224 = vmatpush1.msra.mxu0 %v189
    %225 = vmatprep.subr.mxu0 %v187
    %226 = vmatpush1.msra.mxu0 %v186
    %227 = vmatprep.subr.mxu0 %v184
    %228 = vmatpush1.msra.mxu0 %v183
    %229 = vmatprep.subr.mxu0 %v181
    %230 = vmatpush1.msra.mxu0 %v180
    %231 = vmatprep.subr.mxu0 %v178
    %232 = vmatpush1.msra.mxu0 %v177
    %233 = vmatprep.subr.mxu0 %v175
    %234 = vmatpush1.msra.mxu0 %v174
    %235 = vmatprep.subr.mxu0 %v172
    %236 = vmatpush1.msra.mxu0 %v171
    %237 = vmatprep.subr.mxu0 %v169
    %238 = vmatpush1.msra.mxu0 %v168
    %239 = vmatprep.subr.mxu0 %v166
    %240 = vmatpush1.msra.mxu0 %v165
    %241 = vmatprep.subr.mxu0 %v163
    %242 = vmatpush1.msra.mxu0 %v162
    %243 = vmatprep.subr.mxu0 0.0
    %244 = vmatpush2.msra.mxu0 0.0
    %245 = vmatprep.subr.mxu0 0.0
    %246 = vmatpush2.msra.mxu0 0.0
    %247 = vmatprep.subr.mxu0 0.0
    %248 = vmatpush2.msra.mxu0 0.0
    %249 = vmatprep.subr.mxu0 0.0
    %250 = vmatpush2.msra.mxu0 0.0
    %251 = vmatprep.subr.mxu0 0.0
    %252 = vmatpush2.msra.mxu0 0.0
    %253 = vmatprep.subr.mxu0 0.0
    %254 = vmatpush2.msra.mxu0 0.0
    %255 = vmatprep.subr.mxu0 0.0
    %256 = vmatpush2.msra.mxu0 0.0
    %257 = vmatprep.subr.mxu0 0.0
    %258 = vmatpush2.msra.mxu0 0.0
    %259 = vmatprep.subr.mxu0 0.0
    %260 = vmatpush2.msra.mxu0 0.0
    %261 = vmatprep.subr.mxu0 0.0
    %262 = vmatpush2.msra.mxu0 0.0
    %263 = vmatprep.subr.mxu0 0.0
    %264 = vmatpush2.msra.mxu0 0.0
    %265 = vmatprep.subr.mxu0 0.0
    %266 = vmatpush2.msra.mxu0 0.0
    %267 = vmatprep.subr.mxu0 0.0
    %268 = vmatpush2.msra.mxu0 0.0
    %269 = vmatprep.subr.mxu0 0.0
    %270 = vmatpush2.msra.mxu0 0.0
    %271 = vmatprep.subr.mxu0 0.0
    %272 = vmatpush2.msra.mxu0 0.0
    %273 = vmatprep.subr.mxu0 0.0
    %274 = vmatpush2.msra.mxu0 0.0
    %275 = vmatprep.mubr.f32.mxu0 0.0
    %276 = vmatmul.mubr.f32.gmra.mxu0 %v210
    %v277 = vpop.f32.mrf.mxu0
    %v278 = vadd.f32 0.0, %v277
    %v279 = vpop.f32.mrf.mxu0
    %v280 = vadd.f32 0.0, %v279
    %281 = vdwg.mxu0
    %282 = vmatprep.subr.mxu0 0.0
    %283 = vmatpush1.msra.mxu0 %v209
    %284 = vmatprep.subr.mxu0 0.0
    %285 = vmatpush1.msra.mxu0 %v206
    %286 = vmatprep.subr.mxu0 0.0
    %287 = vmatpush1.msra.mxu0 %v203
    %288 = vmatprep.subr.mxu0 0.0
    %289 = vmatpush1.msra.mxu0 %v200
    %290 = vmatprep.subr.mxu0 0.0
    %291 = vmatpush1.msra.mxu0 %v197
    %292 = vmatprep.subr.mxu0 0.0
    %293 = vmatpush1.msra.mxu0 %v194
    %294 = vmatprep.subr.mxu0 0.0
    %295 = vmatpush1.msra.mxu0 %v191
    %296 = vmatprep.subr.mxu0 0.0
    %297 = vmatpush1.msra.mxu0 %v188
    %298 = vmatprep.subr.mxu0 0.0
    %299 = vmatpush1.msra.mxu0 %v185
    %300 = vmatprep.subr.mxu0 0.0
    %301 = vmatpush1.msra.mxu0 %v182
    %302 = vmatprep.subr.mxu0 0.0
    %303 = vmatpush1.msra.mxu0 %v179
    %304 = vmatprep.subr.mxu0 0.0
    %305 = vmatpush1.msra.mxu0 %v176
    %306 = vmatprep.subr.mxu0 0.0
    %307 = vmatpush1.msra.mxu0 %v173
    %308 = vmatprep.subr.mxu0 0.0
    %309 = vmatpush1.msra.mxu0 %v170
    %310 = vmatprep.subr.mxu0 0.0
    %311 = vmatpush1.msra.mxu0 %v167
    %312 = vmatprep.subr.mxu0 0.0
    %313 = vmatpush1.msra.mxu0 %v164
    %314 = vmatprep.subr.mxu0 0.0
    %315 = vmatpush2.msra.mxu0 0.0
    %316 = vmatprep.subr.mxu0 0.0
    %317 = vmatpush2.msra.mxu0 0.0
    %318 = vmatprep.subr.mxu0 0.0
    %319 = vmatpush2.msra.mxu0 0.0
    %320 = vmatprep.subr.mxu0 0.0
    %321 = vmatpush2.msra.mxu0 0.0
    %322 = vmatprep.subr.mxu0 0.0
    %323 = vmatpush2.msra.mxu0 0.0
    %324 = vmatprep.subr.mxu0 0.0
    %325 = vmatpush2.msra.mxu0 0.0
    %326 = vmatprep.subr.mxu0 0.0
    %327 = vmatpush2.msra.mxu0 0.0
    %328 = vmatprep.subr.mxu0 0.0
    %329 = vmatpush2.msra.mxu0 0.0
    %330 = vmatprep.subr.mxu0 0.0
    %331 = vmatpush2.msra.mxu0 0.0
    %332 = vmatprep.subr.mxu0 0.0
    %333 = vmatpush2.msra.mxu0 0.0
    %334 = vmatprep.subr.mxu0 0.0
    %335 = vmatpush2.msra.mxu0 0.0
    %336 = vmatprep.subr.mxu0 0.0
    %337 = vmatpush2.msra.mxu0 0.0
    %338 = vmatprep.subr.mxu0 0.0
    %339 = vmatpush2.msra.mxu0 0.0
    %340 = vmatprep.subr.mxu0 0.0
    %341 = vmatpush2.msra.mxu0 0.0
    %342 = vmatprep.subr.mxu0 0.0
    %343 = vmatpush2.msra.mxu0 0.0
    %344 = vmatprep.subr.mxu0 0.0
    %345 = vmatpush2.msra.mxu0 0.0
    %346 = vmatprep.mubr.f32.mxu0 0.0
    %347 = vmatmul.mubr.f32.gmra.mxu0 %v210
    %v348 = vpop.f32.mrf.mxu0
    %v349 = vadd.f32 0.0, %v348
    %v350 = vpop.f32.mrf.mxu0
    %351 = vdwg.mxu0
    %v354 = vcombine.low %v278, %v280
    %356 = vst [vmem:[#allocation7] sm:$0xff] %v354
    %357 = vst [vmem:[#allocation7 + $0x8] sm:$0xf] %v349
    // Predicated region
    $region18: #{tpu_custom_call.1} parent=1 // pred_check
      _
    $region19: #{tpu_custom_call.1} parent=1 // pred_check_branch
      %359 = sbr.rel (0) target = $region21
    $region20: #{tpu_custom_call.1} parent=1 // pred_region
      %s361 = ssub.s32 192, 192
      %362 = vsyncadd [#allocation4], %s361
      %s364 = sshll.u32 [#allocation7], 4
      %s365 = int_to_ptr.vmem [resolvable:$true] %s364
      %367 = dma.vmem_to_hbm [thread:$0]  %s365, 192, %s2, [#allocation4]
    $region21: #{tpu_custom_call.1} parent=1 // pred_fallthru
      _
    // Predicated region
    $region22: #{tpu_custom_call.1} parent=1 // pred_check
      _
    $region23: #{tpu_custom_call.1} parent=1 // pred_check_branch
      %369 = sbr.rel (0) target = $region25
    $region24: #{tpu_custom_call.1} parent=1 // pred_region
      %370 = dma.done [#allocation4], 192
    $region25: #{tpu_custom_call.1} parent=1 // pred_fallthru
      _
    %371 = vsyncpa [#allocation3], 1
    %372 = vsyncpa [#allocation6], 1
    %373 = vsyncpa [#allocation4], 1

</llo_original>
